<compile_context>
chip_gen: v7x
topology: tpu7x:2x2x1
jax: 0.10.0
libtpu: 0.0.40
codegen_flags: <defaults>
</compile_context>

<pallas_src>
import functools
import math

import numpy as np
import jax
import jax.numpy as jnp
from jax import lax
from jax.experimental import pallas as pl
from jax.experimental.pallas import tpu as pltpu


# ------------- configuration (what an MPCNN subclass __init__ would set) ----
FILTER_WIDTHS = (1, 2, 3, float("inf"))
NON_INF_WIDTHS = tuple(w for w in FILTER_WIDTHS if not math.isinf(w))
INF_WS = float("inf")
N_NI = len(NON_INF_WIDTHS)
N_W = len(FILTER_WIDTHS)

N_HOLISTIC_FILTERS = 8
N_PER_DIM_FILTERS = 2
N_WORD_DIM = 8
SEQ_LEN = 16
BATCH = 2

POOLS_A = ("max", "min", "mean")      # holistic pooling types
POOLS_B = ("max", "min")              # per-dimension pooling types

COS_EPS = 1e-8     # torch F.cosine_similarity eps
DIST_EPS = 1e-6    # torch F.pairwise_distance eps

# Common padded reduction width shared by all comparison groups (sublane axis
# inside the kernel): max of {num filter widths, n_holistic_filters,
# n_word_dim, 1}.
D_MAX = max(N_W, N_HOLISTIC_FILTERS, N_WORD_DIM, 1)


def _round_up(x, m):
    return -(-x // m) * m


# Combined output slab height: abs rows (D_MAX) + cos + euc, rounded up to a
# full sublane group so the kernel does unmasked full-width stores.
OUT_ROWS = _round_up(D_MAX + 2, 8)


# ----------------------- fused Pallas comparison kernel ---------------------
def _compare_kernel(x1_ref, x2_ref, out_ref, *, bounds):
    # x1/x2: (D_MAX, R) f32 — reduction axis on sublanes, rows on lanes.
    # out:   (OUT_ROWS, R) f32 — sublanes [0..D_MAX-1]=|x1-x2|, D_MAX=cos,
    #        D_MAX+1=euc, rest zero.
    base_vni, base_vinf, base_pd, r_total = bounds
    x1 = x1_ref[...]
    x2 = x2_ref[...]
    d, r = x1.shape
    diff = x1 - x2                                       # reused by euc & abs
    dot = jnp.sum(x1 * x2, axis=0, keepdims=True)        # (1, R) sublane reduce
    n1 = jnp.sum(x1 * x1, axis=0, keepdims=True)
    n2 = jnp.sum(x2 * x2, axis=0, keepdims=True)
    # torch: dot / max(||x1||*||x2||, eps)  ==  dot * rsqrt(max(n1*n2, eps^2))
    # (for the inf-pool rows D==1, so this degenerates to ~sign(x1*x2), exactly
    #  as the PyTorch base class does).  rsqrt/sqrt stay on the EUP slot.
    cos = dot * lax.rsqrt(jnp.maximum(n1 * n2, COS_EPS * COS_EPS))
    # Validity mask synthesized in-kernel from static group boundaries instead
    # of an extra HBM->VMEM DMA.  It stops the +DIST_EPS from leaking into the
    # padded reduction rows / padded lanes (padded operand entries are zero,
    # so cos/abs need no masking).
    lane = lax.broadcasted_iota(jnp.int32, (d, r), 1)
    sub = lax.broadcasted_iota(jnp.int32, (d, r), 0)
    d_valid = jnp.where(lane < base_vni, N_W,
              jnp.where(lane < base_vinf, N_HOLISTIC_FILTERS,
              jnp.where(lane < base_pd, 1,
              jnp.where(lane < r_total, N_WORD_DIM, 0))))
    mask = (sub < d_valid).astype(x1.dtype)
    # torch pairwise_distance: ||x1 - x2 + eps||_2 over the *valid* dims only.
    dd = (diff + DIST_EPS) * mask
    euc = jnp.sqrt(jnp.sum(dd * dd, axis=0, keepdims=True))
    pad = jnp.zeros((OUT_ROWS - D_MAX - 2, r), x1.dtype)
    # Single full-slab store: no masked partial-sublane vst.
    out_ref[...] = jnp.concatenate([jnp.abs(diff), cos, euc, pad], axis=0)


def pallas_compare_packed(x1, x2, bounds):
    """One fused comparison call producing a single (OUT_ROWS, R) slab."""
    _, r = x1.shape
    vmem = pl.BlockSpec(memory_space=pltpu.MemorySpace.VMEM)
    # Single-shot kernel (no grid): everything is VMEM resident (~48 KiB), so
    # no pipelining/double-buffer bookkeeping.  Keep the tiny (K<=8)
    # contractions on the VPU+XLU — the MXU would be <3% utilized here.
    # TODO(synk): if batch ever scales so r_pad >~ 1-2K lanes, add a lane-axis
    # grid (block >= (OUT_ROWS, 512)) with
    # compiler_params=pltpu.CompilerParams(dimension_semantics=("parallel",))
    # so v7x's two TensorCores split the lane axis; below that the ~0.35 us
    # per-step overhead outweighs the win.
    kernel = functools.partial(_compare_kernel, bounds=bounds)
    return pl.pallas_call(
        kernel,
        in_specs=[vmem, vmem],
        out_specs=vmem,
        out_shape=jax.ShapeDtypeStruct((OUT_ROWS, r), jnp.float32),
    )(x1, x2)


# ------------------- block construction (plain-JAX glue) --------------------
# TODO(synk): the base class forward() is `pass`; the conv/pool block builders
# belong to MPCNN subclasses, so they are reproduced here as glue with
# deterministic synthetic weights (not loaded from a checkpoint).
def _conv1d(x, w, groups=1):
    # x: (B, Cin, L), w: (Cout, Cin//groups, K) -> (B, Cout, L-K+1)
    return lax.conv_general_dilated(
        x, w, window_strides=(1,), padding="VALID",
        dimension_numbers=("NCH", "OIH", "NCH"),
        feature_group_count=groups)


def init_params(key):
    params = {"holistic": {}, "per_dim": {}}
    for ws in FILTER_WIDTHS:
        if math.isinf(ws):
            continue
        key, k1, k2 = jax.random.split(key, 3)
        params["holistic"][ws] = 0.1 * jax.random.normal(
            k1, (N_HOLISTIC_FILTERS, N_WORD_DIM, int(ws)), jnp.float32)
        params["per_dim"][ws] = 0.1 * jax.random.normal(
            k2, (N_WORD_DIM * N_PER_DIM_FILTERS, 1, int(ws)), jnp.float32)
    return params


def build_blocks(sent, params):
    # sent: (B, n_word_dim, L)
    B = sent.shape[0]
    block_a, block_b = {}, {}
    for ws in FILTER_WIDTHS:
        if math.isinf(ws):
            flat = sent.reshape(B, 1, -1)
            block_a[ws] = {
                "max": jnp.max(flat, axis=2),           # (B, 1)
                "min": jnp.min(flat, axis=2),
                "mean": jnp.mean(flat, axis=2),
            }
            continue
        h = jnp.tanh(_conv1d(sent, params["holistic"][ws]))            # (B, F, L')
        block_a[ws] = {
            "max": jnp.max(h, axis=2),                                  # (B, F)
            "min": jnp.min(h, axis=2),
            "mean": jnp.mean(h, axis=2),
        }
        p = jnp.tanh(_conv1d(sent, params["per_dim"][ws], groups=N_WORD_DIM))
        block_b[ws] = {
            "max": jnp.max(p, axis=2).reshape(B, N_WORD_DIM, N_PER_DIM_FILTERS),
            "min": jnp.min(p, axis=2).reshape(B, N_WORD_DIM, N_PER_DIM_FILTERS),
        }
    return block_a, block_b


# --------------- static row layout, bounds & gather index -------------------
@functools.lru_cache(maxsize=None)
def _layout(batch):
    """Row layout, static group boundaries and gather index for a batch size.

    Row packing order (row axis -> TPU lanes):
      [H]    (pool, b, filter)          D_valid = len(FILTER_WIDTHS)
      [VNI]  (pool, ws1, ws2, b)        D_valid = N_HOLISTIC_FILTERS
      [VINF] (pool, b)                  D_valid = 1
      [PD]   (pool, ws, per_dim_f, b)   D_valid = N_WORD_DIM
    """
    F = N_HOLISTIC_FILTERS
    nA, nB = len(POOLS_A), len(POOLS_B)

    r_h = nA * batch * F
    r_vni = nA * N_NI * N_NI * batch
    r_vinf = nA * batch
    r_pd = nB * N_NI * N_PER_DIM_FILTERS * batch
    base_h = 0
    base_vni = base_h + r_h
    base_vinf = base_vni + r_vni
    base_pd = base_vinf + r_vinf
    r_total = base_pd + r_pd
    r_pad = _round_up(r_total, 128)
    bounds = (base_vni, base_vinf, base_pd, r_total)

    # Flat value pool produced by the kernel: out.reshape(-1) with
    # out = (OUT_ROWS, r_pad): abs on sublanes 0..D_MAX-1, cos on D_MAX,
    # euc on D_MAX+1.
    def abs_i(r, d):
        return d * r_pad + r

    def cos_i(r):
        return D_MAX * r_pad + r

    def euc_i(r):
        return (D_MAX + 1) * r_pad + r

    rows_idx = []
    for b in range(batch):
        feats = []
        # --- horizontal: per pool, cosine over filters then euclidean ---
        for p in range(nA):
            rows = [base_h + (p * batch + b) * F + f for f in range(F)]
            feats += [cos_i(r) for r in rows]
            feats += [euc_i(r) for r in rows]
        # --- vertical, holistic block A (exact PyTorch loop order) ---
        for p in range(nA):
            for ws1 in FILTER_WIDTHS:
                for ws2 in FILTER_WIDTHS:
                    inf1, inf2 = math.isinf(ws1), math.isinf(ws2)
                    if (not inf1) and (not inf2):
                        i1 = NON_INF_WIDTHS.index(ws1)
                        i2 = NON_INF_WIDTHS.index(ws2)
                        r = base_vni + ((p * N_NI + i1) * N_NI + i2) * batch + b
                        feats += [cos_i(r), euc_i(r)]
                        feats += [abs_i(r, d) for d in range(F)]
                    elif inf1 and inf2:
                        r = base_vinf + p * batch + b
                        feats += [cos_i(r), euc_i(r), abs_i(r, 0)]
        # --- vertical, per-dimension block B ---
        for p in range(nB):
            for w in range(N_NI):
                for i in range(N_PER_DIM_FILTERS):
                    r = base_pd + ((p * N_NI + w) * N_PER_DIM_FILTERS + i) * batch + b
                    feats += [cos_i(r), euc_i(r)]
                    feats += [abs_i(r, d) for d in range(N_WORD_DIM)]
        rows_idx.append(feats)
    idx = np.asarray(rows_idx, np.int32)
    return idx, bounds, r_pad


# ------ operand packing, built directly lane-major (no final transpose) -----
def _pack_rows(block_a, block_b, batch, which, r_pad):
    """Pack one sentence's comparison operands into a (D_MAX, r_pad) slab.

    which=0 -> sentence-1 operand (vertical holistic rows vary with ws1),
    which=1 -> sentence-2 operand (vary with ws2).
    """
    F = N_HOLISTIC_FILTERS
    nA, nB = len(POOLS_A), len(POOLS_B)

    # [H] rows (pool, b, filter); D axis = filter width index.
    h = jnp.stack(
        [jnp.stack(
            [jnp.broadcast_to(block_a[ws][pool], (batch, F))
             if math.isinf(ws) else block_a[ws][pool]
             for ws in FILTER_WIDTHS], axis=0)             # (W, B, F)
         for pool in POOLS_A], axis=1)                     # (W, nA, B, F)
    h = h.reshape(N_W, nA * batch * F)

    # [VNI] rows (pool, ws1, ws2, b); D axis = holistic filter index.
    A = jnp.stack([jnp.stack([block_a[ws][pool] for ws in NON_INF_WIDTHS],
                             axis=0)
                   for pool in POOLS_A], axis=0)           # (nA, N_NI, B, F)
    A = jnp.moveaxis(A, 3, 0)                              # (F, nA, N_NI, B)
    if which == 0:
        vni = jnp.broadcast_to(A[:, :, :, None, :],
                               (F, nA, N_NI, N_NI, batch))
    else:
        vni = jnp.broadcast_to(A[:, :, None, :, :],
                               (F, nA, N_NI, N_NI, batch))
    vni = vni.reshape(F, nA * N_NI * N_NI * batch)

    # [VINF] rows (pool, b); D axis = 1.
    vinf = jnp.stack([block_a[INF_WS][pool] for pool in POOLS_A]
                     ).reshape(1, nA * batch)

    # [PD] rows (pool, ws, per_dim_filter, b); D axis = word dim.
    P = jnp.stack([jnp.stack([block_b[ws][pool] for ws in NON_INF_WIDTHS],
                             axis=0)
                   for pool in POOLS_B], axis=0)           # (nB, N_NI, B, D, n_pd)
    pd = jnp.transpose(P, (3, 0, 1, 4, 2)).reshape(
        N_WORD_DIM, nB * N_NI * N_PER_DIM_FILTERS * batch)

    def pad_d(x):
        return jnp.pad(x, ((0, D_MAX - x.shape[0]), (0, 0)))

    packed = jnp.concatenate([pad_d(h), pad_d(vni), pad_d(vinf), pad_d(pd)],
                             axis=1)
    packed = jnp.pad(packed, ((0, 0), (0, r_pad - packed.shape[1])))
    return packed.astype(jnp.float32)                      # (D_MAX, r_pad)


# ----------------------------- forward pass ---------------------------------
def mpcnn_base_forward(q1, q2, params):
    batch = q1.shape[0]
    idx, bounds, r_pad = _layout(batch)
    a1, b1 = build_blocks(q1, params)
    a2, b2 = build_blocks(q2, params)
    x1 = _pack_rows(a1, b1, batch, 0, r_pad)
    x2 = _pack_rows(a2, b2, batch, 1, r_pad)
    out = pallas_compare_packed(x1, x2, bounds)
    value_pool = out.reshape(-1)
    # One static gather reproduces the exact PyTorch concatenation order.
    return jnp.take(value_pool, jnp.asarray(idx), axis=0)


# ---------------- pure-JAX reference (mirrors the torch loops) --------------
def _ref_cos(x1, x2, axis):
    dot = jnp.sum(x1 * x2, axis)
    nrm = jnp.sqrt(jnp.sum(x1 * x1, axis) * jnp.sum(x2 * x2, axis))
    return dot / jnp.maximum(nrm, COS_EPS)


def _ref_dist(x1, x2, axis):
    d = x1 - x2 + DIST_EPS
    return jnp.sqrt(jnp.sum(d * d, axis))


def _ref_horizontal(a1, a2, batch):
    feats = []
    for pool in POOLS_A:
        r1, r2 = [], []
        for ws in FILTER_WIDTHS:
            x1 = a1[ws][pool][:, :, None]
            x2 = a2[ws][pool][:, :, None]
            if math.isinf(ws):
                x1 = jnp.broadcast_to(x1, (batch, N_HOLISTIC_FILTERS, 1))
                x2 = jnp.broadcast_to(x2, (batch, N_HOLISTIC_FILTERS, 1))
            r1.append(x1)
            r2.append(x2)
        r1 = jnp.concatenate(r1, 2)
        r2 = jnp.concatenate(r2, 2)
        feats.append(_ref_cos(r1, r2, 2))
        feats.append(_ref_dist(r1, r2, 2))
    return jnp.concatenate(feats, axis=1)


def _ref_vertical(a1, a2, b1, b2):
    feats = []
    for pool in POOLS_A:
        for ws1 in FILTER_WIDTHS:
            x1 = a1[ws1][pool]
            for ws2 in FILTER_WIDTHS:
                x2 = a2[ws2][pool]
                i1, i2 = math.isinf(ws1), math.isinf(ws2)
                if (not i1 and not i2) or (i1 and i2):
                    feats.append(_ref_cos(x1, x2, 1)[:, None])
                    feats.append(_ref_dist(x1, x2, 1)[:, None])
                    feats.append(jnp.abs(x1 - x2))
    for pool in POOLS_B:
        for ws in NON_INF_WIDTHS:
            for i in range(N_PER_DIM_FILTERS):
                x1 = b1[ws][pool][:, :, i]
                x2 = b2[ws][pool][:, :, i]
                feats.append(_ref_cos(x1, x2, 1)[:, None])
                feats.append(_ref_dist(x1, x2, 1)[:, None])
                feats.append(jnp.abs(x1 - x2))
    return jnp.concatenate(feats, axis=1)


def mpcnn_base_forward_ref(q1, q2, params):
    a1, b1 = build_blocks(q1, params)
    a2, b2 = build_blocks(q2, params)
    return jnp.concatenate(
        [_ref_horizontal(a1, a2, q1.shape[0]), _ref_vertical(a1, a2, b1, b2)],
        axis=1)


if __name__ == "__main__":
    key = jax.random.PRNGKey(0)
    kp, kq1, kq2 = jax.random.split(key, 3)
    params = init_params(kp)
    q1 = jax.random.normal(kq1, (BATCH, N_WORD_DIM, SEQ_LEN), jnp.float32)
    q2 = jax.random.normal(kq2, (BATCH, N_WORD_DIM, SEQ_LEN), jnp.float32)

    fwd = jax.jit(mpcnn_base_forward)
    out = jax.block_until_ready(fwd(q1, q2, params))

    # correctness check against a pure-JAX reference that mirrors torch loops
    ref = jax.block_until_ready(jax.jit(mpcnn_base_forward_ref)(q1, q2, params))
    np.testing.assert_allclose(np.asarray(out), np.asarray(ref),
                               rtol=1e-4, atol=1e-5)

    exp_h = len(POOLS_A) * 2 * N_HOLISTIC_FILTERS
    exp_v = (len(POOLS_A) * (N_NI * N_NI * (2 + N_HOLISTIC_FILTERS) + (2 + 1))
             + len(POOLS_B) * N_NI * N_PER_DIM_FILTERS * (2 + N_WORD_DIM))
    assert out.shape == (BATCH, exp_h + exp_v), out.shape
    assert bool(jnp.all(jnp.isfinite(out)))
    print("KERNEL_OK")
</pallas_src>

<mosaic_0001>
module attributes {stable_mosaic.version = 11 : i64} {
  func.func @_compare_kernel(%arg0: memref<8x256xf32, #tpu.memory_space<vmem>>, %arg1: memref<8x256xf32, #tpu.memory_space<vmem>>, %arg2: memref<16x256xf32, #tpu.memory_space<vmem>>) attributes {dimension_semantics = [], scalar_prefetch = 0 : i64, scratch_operands = 0 : i64, tpu.core_type = #tpu.core_type<tc>} {
    %c0 = arith.constant 0 : index
    %c0_0 = arith.constant 0 : index
    %0 = vector.load %arg0[%c0, %c0_0] : memref<8x256xf32, #tpu.memory_space<vmem>>, vector<8x256xf32>
    %c0_1 = arith.constant 0 : index
    %c0_2 = arith.constant 0 : index
    %1 = vector.load %arg1[%c0_1, %c0_2] : memref<8x256xf32, #tpu.memory_space<vmem>>, vector<8x256xf32>
    %2 = arith.subf %0, %1 : vector<8x256xf32>
    %3 = arith.mulf %0, %1 : vector<8x256xf32>
    %cst = arith.constant dense<0.000000e+00> : vector<256xf32>
    %4 = vector.multi_reduction <add>, %3, %cst [0] : vector<8x256xf32> to vector<256xf32>
    %5 = vector.shape_cast %4 : vector<256xf32> to vector<1x256xf32>
    %6 = arith.mulf %0, %0 : vector<8x256xf32>
    %cst_3 = arith.constant dense<0.000000e+00> : vector<256xf32>
    %7 = vector.multi_reduction <add>, %6, %cst_3 [0] : vector<8x256xf32> to vector<256xf32>
    %8 = vector.shape_cast %7 : vector<256xf32> to vector<1x256xf32>
    %9 = arith.mulf %1, %1 : vector<8x256xf32>
    %cst_4 = arith.constant dense<0.000000e+00> : vector<256xf32>
    %10 = vector.multi_reduction <add>, %9, %cst_4 [0] : vector<8x256xf32> to vector<256xf32>
    %11 = vector.shape_cast %10 : vector<256xf32> to vector<1x256xf32>
    %12 = arith.mulf %8, %11 : vector<1x256xf32>
    %cst_5 = arith.constant 1.000000e-16 : f32
    %13 = vector.broadcast %cst_5 : f32 to vector<1x256xf32>
    %14 = arith.maximumf %12, %13 : vector<1x256xf32>
    %15 = math.rsqrt %14 : vector<1x256xf32>
    %16 = arith.mulf %5, %15 : vector<1x256xf32>
    %17 = tpu.iota {dimensions = array<i32: 1>} : vector<8x256xi32>
    %18 = tpu.iota {dimensions = array<i32: 0>} : vector<8x256xi32>
    %c48_i32 = arith.constant 48 : i32
    %19 = vector.broadcast %c48_i32 : i32 to vector<8x256xi32>
    %20 = arith.cmpi slt, %17, %19 : vector<8x256xi32>
    %c102_i32 = arith.constant 102 : i32
    %21 = vector.broadcast %c102_i32 : i32 to vector<8x256xi32>
    %22 = arith.cmpi slt, %17, %21 : vector<8x256xi32>
    %c108_i32 = arith.constant 108 : i32
    %23 = vector.broadcast %c108_i32 : i32 to vector<8x256xi32>
    %24 = arith.cmpi slt, %17, %23 : vector<8x256xi32>
    %c132_i32 = arith.constant 132 : i32
    %25 = vector.broadcast %c132_i32 : i32 to vector<8x256xi32>
    %26 = arith.cmpi slt, %17, %25 : vector<8x256xi32>
    %c8_i32 = arith.constant 8 : i32
    %c0_i32 = arith.constant 0 : i32
    %27 = vector.broadcast %c8_i32 : i32 to vector<8x256xi32>
    %28 = vector.broadcast %c0_i32 : i32 to vector<8x256xi32>
    %29 = arith.select %26, %27, %28 : vector<8x256xi1>, vector<8x256xi32>
    %c1_i32 = arith.constant 1 : i32
    %30 = vector.broadcast %c1_i32 : i32 to vector<8x256xi32>
    %31 = arith.select %24, %30, %29 : vector<8x256xi1>, vector<8x256xi32>
    %c8_i32_6 = arith.constant 8 : i32
    %32 = vector.broadcast %c8_i32_6 : i32 to vector<8x256xi32>
    %33 = arith.select %22, %32, %31 : vector<8x256xi1>, vector<8x256xi32>
    %c4_i32 = arith.constant 4 : i32
    %34 = vector.broadcast %c4_i32 : i32 to vector<8x256xi32>
    %35 = arith.select %20, %34, %33 : vector<8x256xi1>, vector<8x256xi32>
    %36 = arith.cmpi slt, %18, %35 : vector<8x256xi32>
    %37 = arith.extui %36 : vector<8x256xi1> to vector<8x256xi32>
    %38 = arith.sitofp %37 : vector<8x256xi32> to vector<8x256xf32>
    %cst_7 = arith.constant 9.99999997E-7 : f32
    %39 = vector.broadcast %cst_7 : f32 to vector<8x256xf32>
    %40 = arith.addf %2, %39 : vector<8x256xf32>
    %41 = arith.mulf %40, %38 : vector<8x256xf32>
    %42 = arith.mulf %41, %41 : vector<8x256xf32>
    %cst_8 = arith.constant dense<0.000000e+00> : vector<256xf32>
    %43 = vector.multi_reduction <add>, %42, %cst_8 [0] : vector<8x256xf32> to vector<256xf32>
    %44 = vector.shape_cast %43 : vector<256xf32> to vector<1x256xf32>
    %45 = math.sqrt %44 : vector<1x256xf32>
    %cst_9 = arith.constant 0.000000e+00 : f32
    %46 = vector.broadcast %cst_9 : f32 to vector<6x256xf32>
    %47 = math.absf %2 : vector<8x256xf32>
    %48 = tpu.concatenate %47, %16, %45, %46 in 0 : vector<8x256xf32>, vector<1x256xf32>, vector<1x256xf32>, vector<6x256xf32> -> vector<16x256xf32>
    %c0_10 = arith.constant 0 : index
    %c0_11 = arith.constant 0 : index
    %49 = vector.load %arg2[%c0_10, %c0_11] : memref<16x256xf32, #tpu.memory_space<vmem>>, vector<16x256xf32>
    tpu.vector_store %arg2[%c0_10, %c0_11], %48 {strides = array<i32>} : memref<16x256xf32, #tpu.memory_space<vmem>>, vector<16x256xf32>,
    return
  }
}

</mosaic_0001>

<llo_original>
// kernel: mpcnn_base_forward.1
$region0: #{mpcnn_base_forward.1}
  #allocation0 [shape = 'u32[]', space=smem, size = 0x4, offset = 0x4, fixed_abs, tag = 'smem constant byte address 0x4 - core index']
  #allocation1 [shape = 'u32[144,128]{1,0:T(1,128)}', space=vmem, size = 0x12000, scoped, tag = 'internal scratch']
  %s0 = inlined_call_operand.vmem [shape: f32[8,256], index: 0, kind: input, shape index: {}]
  %s1 = inlined_call_operand.vmem [shape: f32[8,256], index: 1, kind: input, shape index: {}]
  %s2 = inlined_call_operand.vmem [shape: f32[16,256], index: 2, kind: output, shape index: {}]
  %s3 = sld [smem:[#allocation0]]
  $region18: #{mpcnn_base_forward.1} parent=0
    _
  %s5 = ssub.s32 1, %s3
  %s6 = scalar_select 0, %s5, %s3
  // Predicated region
  $region2: #{mpcnn_base_forward.1} parent=0 // pred_check
    _
  $region3: #{mpcnn_base_forward.1} parent=0 // pred_check_branch
    %8 = sbr.rel (0) target = $region5
  $region4: #{mpcnn_base_forward.1} parent=0 // pred_region
    _
  $region5: #{mpcnn_base_forward.1} parent=0 // pred_fallthru
    _
  // Predicated region
  $region6: #{mpcnn_base_forward.1} parent=0 // pred_check
    _
  $region7: #{mpcnn_base_forward.1} parent=0 // pred_check_branch
    %10 = sbr.rel (0) target = $region9
  $region8: #{mpcnn_base_forward.1} parent=0 // pred_region
    _
  $region9: #{mpcnn_base_forward.1} parent=0 // pred_fallthru
    _
  %v11 = vld [vmem:[%s0] sm:$0xff]
  %v12 = vld [vmem:[%s0 + $0x8] sm:$0xff]
  %v13 = vld [vmem:[%s1] sm:$0xff]
  %v14 = vld [vmem:[%s1 + $0x8] sm:$0xff]
  %v15 = vsub.f32 %v11, %v13
  %v16 = vsub.f32 %v12, %v14
  %v17 = vmul.f32 %v11, %v13
  %v18 = vmul.f32 %v12, %v14
  %v19 = vrot.slane %v17, 4
  %v20 = vadd.f32 %v17, %v19
  %v21 = vrot.slane %v20, 2
  %v22 = vadd.f32 %v20, %v21
  %v23 = vrot.slane %v22, 1
  %v24 = vadd.f32 %v22, %v23
  %v25 = vrot.slane %v18, 4
  %v26 = vadd.f32 %v18, %v25
  %v27 = vrot.slane %v26, 2
  %v28 = vadd.f32 %v26, %v27
  %v29 = vrot.slane %v28, 1
  %v30 = vadd.f32 %v28, %v29
  %v31 = vmul.f32 %v11, %v11
  %v32 = vmul.f32 %v12, %v12
  %v33 = vrot.slane %v31, 4
  %v34 = vadd.f32 %v31, %v33
  %v35 = vrot.slane %v34, 2
  %v36 = vadd.f32 %v34, %v35
  %v37 = vrot.slane %v36, 1
  %v38 = vadd.f32 %v36, %v37
  %v39 = vrot.slane %v32, 4
  %v40 = vadd.f32 %v32, %v39
  %v41 = vrot.slane %v40, 2
  %v42 = vadd.f32 %v40, %v41
  %v43 = vrot.slane %v42, 1
  %v44 = vadd.f32 %v42, %v43
  %v45 = vmul.f32 %v13, %v13
  %v46 = vmul.f32 %v14, %v14
  %v47 = vrot.slane %v45, 4
  %v48 = vadd.f32 %v45, %v47
  %v49 = vrot.slane %v48, 2
  %v50 = vadd.f32 %v48, %v49
  %v51 = vrot.slane %v50, 1
  %v52 = vadd.f32 %v50, %v51
  %v53 = vrot.slane %v46, 4
  %v54 = vadd.f32 %v46, %v53
  %v55 = vrot.slane %v54, 2
  %v56 = vadd.f32 %v54, %v55
  %v57 = vrot.slane %v56, 1
  %v58 = vadd.f32 %v56, %v57
  %v59 = vmul.f32 %v38, %v52
  %v60 = vmul.f32 %v44, %v58
  %v61 = vmax.f32 %v59, 1e-16
  %v62 = vmax.f32 %v60, 1e-16
  %v63 = vrsqrt.pop %v61
  %v64 = vrsqrt.pop %v62
  %v65 = vmul.f32 %v24, %v63
  %v66 = vmul.f32 %v30, %v64
  %v67 = vlaneseq
  %v68 = vand.u32 %v67, 127
  %v69 = vadd.s32 %v68, 128
  %v70 = vlaneseq
  %v71 = vshrl.u32 %v70, 7
  %vm72 = vcmp.lt.s32.totalorder %v68, 48
  %vm73 = vcmp.lt.s32.totalorder %v69, 48
  %vm74 = vcmp.lt.s32.totalorder %v68, 102
  %vm75 = vcmp.lt.s32.totalorder %v69, 102
  %vm76 = vcmp.lt.s32.totalorder %v68, 108
  %vm77 = vcmp.lt.s32.totalorder %v69, 108
  %vm78 = vcmp.lt.s32.totalorder %v68, 132
  %vm79 = vcmp.lt.s32.totalorder %v69, 132
  %v80 = vsel %vm78, 8, 0
  %v81 = vsel %vm79, 8, 0
  %v82 = vsel %vm76, 1, %v80
  %v83 = vsel %vm77, 1, %v81
  %v84 = vsel %vm74, 8, %v82
  %v85 = vsel %vm75, 8, %v83
  %v86 = vsel %vm72, 4, %v84
  %v87 = vsel %vm73, 4, %v85
  %vm88 = vcmp.lt.s32.totalorder %v71, %v86
  %vm89 = vcmp.lt.s32.totalorder %v71, %v87
  %v90 = vsel %vm88, 1, 0
  %v91 = vsel %vm89, 1, 0
  %v92 = vcvt.s32.f32 %v90
  %v93 = vcvt.s32.f32 %v91
  %v94 = vadd.f32 %v15, 1e-06
  %v95 = vadd.f32 %v16, 1e-06
  %v96 = vmul.f32 %v94, %v92
  %v97 = vmul.f32 %v95, %v93
  %v98 = vmul.f32 %v96, %v96
  %v99 = vmul.f32 %v97, %v97
  %v100 = vrot.slane %v98, 4
  %v101 = vadd.f32 %v98, %v100
  %v102 = vrot.slane %v101, 2
  %v103 = vadd.f32 %v101, %v102
  %v104 = vrot.slane %v103, 1
  %v105 = vadd.f32 %v103, %v104
  %v106 = vrot.slane %v99, 4
  %v107 = vadd.f32 %v99, %v106
  %v108 = vrot.slane %v107, 2
  %v109 = vadd.f32 %v107, %v108
  %v110 = vrot.slane %v109, 1
  %v111 = vadd.f32 %v109, %v110
  %v112 = vrsqrt.pop %v105
  %v113 = vmul.f32 %v105, %v112
  %vm114 = vcmp.eq.f32.partialorder %v105, inf
  %v115 = vsel %vm114, %v105, %v113
  %vm116 = vcmp.eq.f32.partialorder %v105, 0.0
  %v117 = vand.u32 %v105, 2147483648
  %v118 = vsel %vm116, %v117, %v115
  %v119 = vrsqrt.pop %v111
  %v120 = vmul.f32 %v111, %v119
  %vm121 = vcmp.eq.f32.partialorder %v111, inf
  %v122 = vsel %vm121, %v111, %v120
  %vm123 = vcmp.eq.f32.partialorder %v111, 0.0
  %v124 = vand.u32 %v111, 2147483648
  %v125 = vsel %vm123, %v124, %v122
  %v126 = vand.u32 2147483647, %v15
  %v127 = vand.u32 2147483647, %v16
  %vm128 = vcmask 1040384
  %v129 = vsel %vm128, %v65, %v118
  %v130 = vsel %vm128, %v66, %v125
  %vm131 = vcmask 1041408
  %v132 = vsel %vm131, %v129, 0.0
  %v133 = vsel %vm131, %v130, 0.0
  %134 = vst [vmem:[%s2] sm:$0xff] %v126
  %135 = vst [vmem:[%s2 + $0x8] sm:$0xff] %v127
  %136 = vst [vmem:[%s2 + $0x10] sm:$0xff] %v132
  %137 = vst [vmem:[%s2 + $0x18] sm:$0xff] %v133
  // Predicated region
  $region10: #{mpcnn_base_forward.1} parent=0 // pred_check
    _
  $region11: #{mpcnn_base_forward.1} parent=0 // pred_check_branch
    %139 = sbr.rel (0) target = $region13
  $region12: #{mpcnn_base_forward.1} parent=0 // pred_region
    _
  $region13: #{mpcnn_base_forward.1} parent=0 // pred_fallthru
    _
  // Predicated region
  $region14: #{mpcnn_base_forward.1} parent=0 // pred_check
    _
  $region15: #{mpcnn_base_forward.1} parent=0 // pred_check_branch
    %141 = sbr.rel (0) target = $region17
  $region16: #{mpcnn_base_forward.1} parent=0 // pred_region
    _
  $region17: #{mpcnn_base_forward.1} parent=0 // pred_fallthru
    _

</llo_original>
